<compile_context>
chip_gen: v6e
topology: v6e:2x2x1
jax: 0.10.0
libtpu: 0.0.40
codegen_flags: <defaults>
</compile_context>

<pallas_src>
import itertools

import jax
import jax.numpy as jnp
import numpy as np
from jax.experimental import pallas as pl
from jax.experimental.pallas import tpu as pltpu


def _make_cost_kernel(cost_bbox_w: float, cost_giou_w: float):
    def cost_kernel(logits_ref, onehot_t_ref, ob_ref, tbt_ref, c_ref):
        # ---- classification cost: softmax(logits) @ (-w_class * onehot) ----
        logits = logits_ref[...]                                     # (TN, C) f32
        m = jnp.max(logits, axis=-1, keepdims=True)
        e = jnp.exp(logits - m)
        inv_sum = pl.reciprocal(jnp.sum(e, axis=-1, keepdims=True), approx=True)
        prob = (e * inv_sum).astype(jnp.bfloat16)                    # (TN, C) bf16
        # onehot_t_ref already carries the factor (-cost_class_w), bf16 (C, Tp)
        class_term = jnp.dot(prob, onehot_t_ref[...],
                             preferred_element_type=jnp.float32)     # (TN, Tp)

        # ---- box costs ----
        ob = ob_ref[...]        # (TN, 4) cxcywh, f32
        tbt = tbt_ref[...]      # (4, Tp) cxcywh (transposed), f32
        ocx, ocy, ow, oh = ob[:, 0:1], ob[:, 1:2], ob[:, 2:3], ob[:, 3:4]      # (TN,1)
        tcx, tcy, tw, th = tbt[0:1, :], tbt[1:2, :], tbt[2:3, :], tbt[3:4, :]  # (1,Tp)

        # L1 cdist on cxcywh (matches torch.cdist(..., p=1))
        cost_bbox = (jnp.abs(ocx - tcx) + jnp.abs(ocy - tcy)
                     + jnp.abs(ow - tw) + jnp.abs(oh - th))          # (TN, Tp)

        # cxcywh -> xyxy corners
        ox0, oy0 = ocx - 0.5 * ow, ocy - 0.5 * oh
        ox1, oy1 = ocx + 0.5 * ow, ocy + 0.5 * oh
        tx0, ty0 = tcx - 0.5 * tw, tcy - 0.5 * th
        tx1, ty1 = tcx + 0.5 * tw, tcy + 0.5 * th

        # intersection / union / IoU (areas straight from w*h)
        inter_w = jnp.maximum(jnp.minimum(ox1, tx1) - jnp.maximum(ox0, tx0), 0.0)
        inter_h = jnp.maximum(jnp.minimum(oy1, ty1) - jnp.maximum(oy0, ty0), 0.0)
        inter = inter_w * inter_h                                    # (TN, Tp)
        union = ow * oh + tw * th - inter
        iou = inter * pl.reciprocal(union, approx=True)

        # smallest enclosing box (non-negative for valid boxes -> no clamp)
        enc_w = jnp.maximum(ox1, tx1) - jnp.minimum(ox0, tx0)
        enc_h = jnp.maximum(oy1, ty1) - jnp.minimum(oy0, ty0)
        enc_area = enc_w * enc_h
        giou = iou - (enc_area - union) * pl.reciprocal(enc_area, approx=True)

        # class_term already = cost_class_w * cost_class ; cost_giou = -giou
        c_ref[...] = class_term + cost_bbox_w * cost_bbox - cost_giou_w * giou

    return cost_kernel


def _pick_row_tile(n_rows: int, num_classes: int, t_pad: int) -> int:
    """Largest row tile (multiple of 8, <= 1024) fitting a conservative VMEM budget."""
    budget = 24 * 1024 * 1024  # headroom for v7x's smaller VMEM
    resident = 2 * (num_classes * t_pad * 2 + 4 * t_pad * 4)  # bf16 onehot + f32 tbt, 2 bufs
    per_row = 2 * ((num_classes + 4) * 4 + t_pad * 4)          # f32 in + f32 out, 2 bufs
    tn = 8
    for cand in (1024, 512, 256, 128, 64, 32, 16, 8):
        if resident + cand * per_row <= budget:
            tn = cand
            break
    n_pad8 = ((n_rows + 7) // 8) * 8
    return min(tn, n_pad8)


def pallas_cost_matrix(pred_logits, pred_boxes, tgt_ids, tgt_boxes,
                       cost_class=1.0, cost_bbox=1.0, cost_giou=1.0):
    """Returns C of shape (bs, num_queries, T_total), fp32."""
    bs, nq, num_classes = pred_logits.shape
    N = bs * nq
    T = int(tgt_boxes.shape[0])

    # ---- pad T to a lane-dense multiple of 128 ----
    T_pad = max(128, ((T + 127) // 128) * 128)

    # ---- pick row tile and pad N to a multiple of it ----
    TN = _pick_row_tile(N, num_classes, T_pad)
    N_pad = pl.cdiv(N, TN) * TN

    logits = pred_logits.reshape(N, num_classes).astype(jnp.float32)
    out_bbox = pred_boxes.reshape(N, 4).astype(jnp.float32)
    if N_pad > N:
        logits = jnp.pad(logits, ((0, N_pad - N), (0, 0)))
        # pad rows with harmless zero boxes (only matched against valid targets)
        out_bbox = jnp.pad(out_bbox, ((0, N_pad - N), (0, 0)))

    # one-hot table with -cost_class folded in, padded columns = 0, bf16
    onehot_t = (-float(cost_class)) * jax.nn.one_hot(
        tgt_ids, num_classes, dtype=jnp.float32).T                     # (C, T)
    onehot_t = jnp.pad(onehot_t, ((0, 0), (0, T_pad - T))).astype(jnp.bfloat16)

    # target boxes, padded with valid dummy boxes (w=h=1) so no div-by-zero
    tgt_bbox = tgt_boxes.astype(jnp.float32)                           # (T, 4)
    if T_pad > T:
        dummy = jnp.tile(jnp.array([[0.5, 0.5, 1.0, 1.0]], jnp.float32),
                         (T_pad - T, 1))
        tgt_bbox = jnp.concatenate([tgt_bbox, dummy], axis=0)
    tgt_bbox_t = tgt_bbox.T                                            # (4, T_pad)

    kernel = _make_cost_kernel(float(cost_bbox), float(cost_giou))

    # explicit scoped-VMEM budget (clamped to stay v7x-safe)
    vmem_est = (2 * (TN * (num_classes + 4) * 4 + TN * T_pad * 4
                     + num_classes * T_pad * 2 + 4 * T_pad * 4)) + (2 << 20)
    vmem_limit = int(min(max(vmem_est, 8 << 20), 48 << 20))

    c_flat = pl.pallas_call(
        kernel,
        out_shape=jax.ShapeDtypeStruct((N_pad, T_pad), jnp.float32),
        grid=(N_pad // TN,),
        in_specs=[
            pl.BlockSpec((TN, num_classes), lambda i: (i, 0)),
            pl.BlockSpec((num_classes, T_pad), lambda i: (0, 0)),
            pl.BlockSpec((TN, 4), lambda i: (i, 0)),
            pl.BlockSpec((4, T_pad), lambda i: (0, 0)),
        ],
        out_specs=pl.BlockSpec((TN, T_pad), lambda i: (i, 0)),
        compiler_params=pltpu.CompilerParams(
            dimension_semantics=("parallel",),
            vmem_limit_bytes=vmem_limit),
    )(logits, onehot_t, out_bbox, tgt_bbox_t)

    return c_flat[:N, :T].reshape(bs, nq, T)


def _linear_sum_assignment_bruteforce(cost):
    """Minimal host-side replacement for scipy.optimize.linear_sum_assignment
    (exact, brute force; fine for the small demo shapes)."""
    # TODO(synk): the Hungarian assignment itself (data-dependent, combinatorial)
    # has no clean Pallas equivalent; it runs on the host like the .cpu() path
    # in the PyTorch reference.
    cost = np.asarray(cost)
    r, c = cost.shape
    best = None
    best_pairs = None
    if r <= c:
        for perm in itertools.permutations(range(c), r):
            s = sum(cost[i, perm[i]] for i in range(r))
            if best is None or s < best:
                best, best_pairs = s, [(i, perm[i]) for i in range(r)]
    else:
        for perm in itertools.permutations(range(r), c):
            s = sum(cost[perm[j], j] for j in range(c))
            if best is None or s < best:
                best, best_pairs = s, [(perm[j], j) for j in range(c)]
    best_pairs.sort(key=lambda p: p[0])
    rows = np.array([p[0] for p in best_pairs], dtype=np.int64)
    cols = np.array([p[1] for p in best_pairs], dtype=np.int64)
    return rows, cols


def hungarian_matcher(outputs, targets, cost_class=1.0, cost_bbox=1.0, cost_giou=1.0):
    """Mirrors HungarianMatcher.forward semantics."""
    tgt_ids = jnp.concatenate([t["labels"] for t in targets], axis=0)
    tgt_boxes = jnp.concatenate([t["boxes"] for t in targets], axis=0)

    C = pallas_cost_matrix(outputs["pred_logits"], outputs["pred_boxes"],
                           tgt_ids, tgt_boxes,
                           cost_class=cost_class, cost_bbox=cost_bbox,
                           cost_giou=cost_giou)
    C = jax.block_until_ready(C)
    C_np = np.asarray(C)  # (bs, nq, T_total)

    sizes = [int(t["boxes"].shape[0]) for t in targets]
    indices = []
    offset = 0
    for i, sz in enumerate(sizes):
        chunk = C_np[i, :, offset:offset + sz]
        indices.append(_linear_sum_assignment_bruteforce(chunk))
        offset += sz
    return [(jnp.asarray(r, dtype=jnp.int64), jnp.asarray(c, dtype=jnp.int64))
            for r, c in indices], C


if __name__ == "__main__":
    key = jax.random.PRNGKey(0)
    bs, num_queries, num_classes = 2, 8, 16
    sizes = [3, 4]  # targets per batch element

    k1, k2, k3, k4 = jax.random.split(key, 4)

    pred_logits = jax.random.normal(k1, (bs, num_queries, num_classes), dtype=jnp.float32)
    # predicted boxes: positive w/h, centers in (0,1)
    pred_cxcy = jax.random.uniform(k2, (bs, num_queries, 2), minval=0.2, maxval=0.8)
    pred_wh = jax.random.uniform(k2, (bs, num_queries, 2), minval=0.1, maxval=0.4)
    pred_boxes = jnp.concatenate([pred_cxcy, pred_wh], axis=-1)

    targets = []
    for b, sz in enumerate(sizes):
        kk = jax.random.fold_in(k3, b)
        labels = jax.random.randint(kk, (sz,), 0, num_classes, dtype=jnp.int32)
        kb = jax.random.fold_in(k4, b)
        t_cxcy = jax.random.uniform(kb, (sz, 2), minval=0.2, maxval=0.8)
        t_wh = jax.random.uniform(jax.random.fold_in(kb, 1), (sz, 2), minval=0.1, maxval=0.4)
        targets.append({"labels": labels,
                        "boxes": jnp.concatenate([t_cxcy, t_wh], axis=-1)})

    outputs = {"pred_logits": pred_logits, "pred_boxes": pred_boxes}

    indices, C = hungarian_matcher(outputs, targets,
                                   cost_class=1.0, cost_bbox=1.0, cost_giou=1.0)
    jax.block_until_ready(C)

    # basic sanity: one pair of index arrays per batch element, correct lengths,
    # and a finite cost matrix
    assert len(indices) == bs
    for (ri, ci), sz in zip(indices, sizes):
        assert ri.shape[0] == min(num_queries, sz)
        assert ci.shape[0] == min(num_queries, sz)
    assert bool(jnp.all(jnp.isfinite(C)))

    print("KERNEL_OK")
</pallas_src>

<mosaic_0001>
module attributes {stable_mosaic.version = 11 : i64} {
  func.func @cost_kernel(%arg0: i32, %arg1: memref<16x16xf32, #tpu.memory_space<vmem>>, %arg2: memref<16x128xbf16, #tpu.memory_space<vmem>>, %arg3: memref<16x4xf32, #tpu.memory_space<vmem>>, %arg4: memref<4x128xf32, #tpu.memory_space<vmem>>, %arg5: memref<16x128xf32, #tpu.memory_space<vmem>>) attributes {dimension_semantics = [#tpu.dimension_semantics<parallel>], iteration_bounds = array<i64: 1>, scalar_prefetch = 0 : i64, scratch_operands = 0 : i64, tpu.core_type = #tpu.core_type<tc>, window_params = [{transform_indices = @transform_0, window_bounds = array<i64: 16, 16>}, {pipeline_mode = #tpu.pipeline_mode<synchronous>, transform_indices = @transform_1, window_bounds = array<i64: 16, 128>}, {transform_indices = @transform_2, window_bounds = array<i64: 16, 4>}, {pipeline_mode = #tpu.pipeline_mode<synchronous>, transform_indices = @transform_3, window_bounds = array<i64: 4, 128>}, {transform_indices = @transform_4, window_bounds = array<i64: 16, 128>}]} {
    %c0 = arith.constant 0 : index
    %c0_0 = arith.constant 0 : index
    %0 = vector.load %arg1[%c0, %c0_0] : memref<16x16xf32, #tpu.memory_space<vmem>>, vector<16x16xf32>
    %cst = arith.constant dense<0xFF800000> : vector<16xf32>
    %1 = vector.multi_reduction <maximumf>, %0, %cst [1] : vector<16x16xf32> to vector<16xf32>
    %2 = vector.shape_cast %1 : vector<16xf32> to vector<16x1xf32>
    %3 = vector.broadcast %2 : vector<16x1xf32> to vector<16x16xf32>
    %4 = arith.subf %0, %3 : vector<16x16xf32>
    %5 = math.exp %4 : vector<16x16xf32>
    %cst_1 = arith.constant dense<0.000000e+00> : vector<16xf32>
    %6 = vector.multi_reduction <add>, %5, %cst_1 [1] : vector<16x16xf32> to vector<16xf32>
    %7 = vector.shape_cast %6 : vector<16xf32> to vector<16x1xf32>
    %8 = tpu.reciprocal %7 {approx = true} : vector<16x1xf32> -> vector<16x1xf32>
    %9 = vector.broadcast %8 : vector<16x1xf32> to vector<16x16xf32>
    %10 = arith.mulf %5, %9 : vector<16x16xf32>
    %11 = arith.truncf %10 : vector<16x16xf32> to vector<16x16xbf16>
    %c0_2 = arith.constant 0 : index
    %c0_3 = arith.constant 0 : index
    %12 = vector.load %arg2[%c0_2, %c0_3] : memref<16x128xbf16, #tpu.memory_space<vmem>>, vector<16x128xbf16>
    %cst_4 = arith.constant dense<0.000000e+00> : vector<16x128xf32>
    %13 = tpu.matmul %11, %12, %cst_4 {dimension_numbers = #tpu.dot_dimension_numbers<[1], [0], [0], [1], [0, 0, 1, 1], [], []>} : vector<16x16xbf16>, vector<16x128xbf16>, vector<16x128xf32> -> vector<16x128xf32>
    %c0_5 = arith.constant 0 : index
    %c0_6 = arith.constant 0 : index
    %14 = vector.load %arg3[%c0_5, %c0_6] : memref<16x4xf32, #tpu.memory_space<vmem>>, vector<16x4xf32>
    %c0_7 = arith.constant 0 : index
    %c0_8 = arith.constant 0 : index
    %15 = vector.load %arg4[%c0_7, %c0_8] : memref<4x128xf32, #tpu.memory_space<vmem>>, vector<4x128xf32>
    %16 = vector.extract_strided_slice %14 {offsets = [0, 0], sizes = [16, 1], strides = [1, 1]} : vector<16x4xf32> to vector<16x1xf32>
    %17 = vector.extract_strided_slice %14 {offsets = [0, 1], sizes = [16, 1], strides = [1, 1]} : vector<16x4xf32> to vector<16x1xf32>
    %18 = vector.extract_strided_slice %14 {offsets = [0, 2], sizes = [16, 1], strides = [1, 1]} : vector<16x4xf32> to vector<16x1xf32>
    %19 = vector.extract_strided_slice %14 {offsets = [0, 3], sizes = [16, 1], strides = [1, 1]} : vector<16x4xf32> to vector<16x1xf32>
    %20 = vector.extract_strided_slice %15 {offsets = [0, 0], sizes = [1, 128], strides = [1, 1]} : vector<4x128xf32> to vector<1x128xf32>
    %21 = vector.extract_strided_slice %15 {offsets = [1, 0], sizes = [1, 128], strides = [1, 1]} : vector<4x128xf32> to vector<1x128xf32>
    %22 = vector.extract_strided_slice %15 {offsets = [2, 0], sizes = [1, 128], strides = [1, 1]} : vector<4x128xf32> to vector<1x128xf32>
    %23 = vector.extract_strided_slice %15 {offsets = [3, 0], sizes = [1, 128], strides = [1, 1]} : vector<4x128xf32> to vector<1x128xf32>
    %24 = vector.broadcast %16 : vector<16x1xf32> to vector<16x128xf32>
    %25 = vector.broadcast %20 : vector<1x128xf32> to vector<16x128xf32>
    %26 = arith.subf %24, %25 : vector<16x128xf32>
    %27 = math.absf %26 : vector<16x128xf32>
    %28 = vector.broadcast %17 : vector<16x1xf32> to vector<16x128xf32>
    %29 = vector.broadcast %21 : vector<1x128xf32> to vector<16x128xf32>
    %30 = arith.subf %28, %29 : vector<16x128xf32>
    %31 = math.absf %30 : vector<16x128xf32>
    %32 = arith.addf %27, %31 : vector<16x128xf32>
    %33 = vector.broadcast %18 : vector<16x1xf32> to vector<16x128xf32>
    %34 = vector.broadcast %22 : vector<1x128xf32> to vector<16x128xf32>
    %35 = arith.subf %33, %34 : vector<16x128xf32>
    %36 = math.absf %35 : vector<16x128xf32>
    %37 = arith.addf %32, %36 : vector<16x128xf32>
    %38 = vector.broadcast %19 : vector<16x1xf32> to vector<16x128xf32>
    %39 = vector.broadcast %23 : vector<1x128xf32> to vector<16x128xf32>
    %40 = arith.subf %38, %39 : vector<16x128xf32>
    %41 = math.absf %40 : vector<16x128xf32>
    %42 = arith.addf %37, %41 : vector<16x128xf32>
    %cst_9 = arith.constant 5.000000e-01 : f32
    %43 = vector.broadcast %cst_9 : f32 to vector<16x1xf32>
    %44 = arith.mulf %43, %18 : vector<16x1xf32>
    %45 = arith.subf %16, %44 : vector<16x1xf32>
    %cst_10 = arith.constant 5.000000e-01 : f32
    %46 = vector.broadcast %cst_10 : f32 to vector<16x1xf32>
    %47 = arith.mulf %46, %19 : vector<16x1xf32>
    %48 = arith.subf %17, %47 : vector<16x1xf32>
    %cst_11 = arith.constant 5.000000e-01 : f32
    %49 = vector.broadcast %cst_11 : f32 to vector<16x1xf32>
    %50 = arith.mulf %49, %18 : vector<16x1xf32>
    %51 = arith.addf %16, %50 : vector<16x1xf32>
    %cst_12 = arith.constant 5.000000e-01 : f32
    %52 = vector.broadcast %cst_12 : f32 to vector<16x1xf32>
    %53 = arith.mulf %52, %19 : vector<16x1xf32>
    %54 = arith.addf %17, %53 : vector<16x1xf32>
    %cst_13 = arith.constant 5.000000e-01 : f32
    %55 = vector.broadcast %cst_13 : f32 to vector<1x128xf32>
    %56 = arith.mulf %55, %22 : vector<1x128xf32>
    %57 = arith.subf %20, %56 : vector<1x128xf32>
    %cst_14 = arith.constant 5.000000e-01 : f32
    %58 = vector.broadcast %cst_14 : f32 to vector<1x128xf32>
    %59 = arith.mulf %58, %23 : vector<1x128xf32>
    %60 = arith.subf %21, %59 : vector<1x128xf32>
    %cst_15 = arith.constant 5.000000e-01 : f32
    %61 = vector.broadcast %cst_15 : f32 to vector<1x128xf32>
    %62 = arith.mulf %61, %22 : vector<1x128xf32>
    %63 = arith.addf %20, %62 : vector<1x128xf32>
    %cst_16 = arith.constant 5.000000e-01 : f32
    %64 = vector.broadcast %cst_16 : f32 to vector<1x128xf32>
    %65 = arith.mulf %64, %23 : vector<1x128xf32>
    %66 = arith.addf %21, %65 : vector<1x128xf32>
    %67 = vector.broadcast %51 : vector<16x1xf32> to vector<16x128xf32>
    %68 = vector.broadcast %63 : vector<1x128xf32> to vector<16x128xf32>
    %69 = arith.minimumf %67, %68 : vector<16x128xf32>
    %70 = vector.broadcast %45 : vector<16x1xf32> to vector<16x128xf32>
    %71 = vector.broadcast %57 : vector<1x128xf32> to vector<16x128xf32>
    %72 = arith.maximumf %70, %71 : vector<16x128xf32>
    %73 = arith.subf %69, %72 : vector<16x128xf32>
    %cst_17 = arith.constant 0.000000e+00 : f32
    %74 = vector.broadcast %cst_17 : f32 to vector<16x128xf32>
    %75 = arith.maximumf %73, %74 : vector<16x128xf32>
    %76 = vector.broadcast %54 : vector<16x1xf32> to vector<16x128xf32>
    %77 = vector.broadcast %66 : vector<1x128xf32> to vector<16x128xf32>
    %78 = arith.minimumf %76, %77 : vector<16x128xf32>
    %79 = vector.broadcast %48 : vector<16x1xf32> to vector<16x128xf32>
    %80 = vector.broadcast %60 : vector<1x128xf32> to vector<16x128xf32>
    %81 = arith.maximumf %79, %80 : vector<16x128xf32>
    %82 = arith.subf %78, %81 : vector<16x128xf32>
    %cst_18 = arith.constant 0.000000e+00 : f32
    %83 = vector.broadcast %cst_18 : f32 to vector<16x128xf32>
    %84 = arith.maximumf %82, %83 : vector<16x128xf32>
    %85 = arith.mulf %75, %84 : vector<16x128xf32>
    %86 = arith.mulf %18, %19 : vector<16x1xf32>
    %87 = arith.mulf %22, %23 : vector<1x128xf32>
    %88 = vector.broadcast %86 : vector<16x1xf32> to vector<16x128xf32>
    %89 = vector.broadcast %87 : vector<1x128xf32> to vector<16x128xf32>
    %90 = arith.addf %88, %89 : vector<16x128xf32>
    %91 = arith.subf %90, %85 : vector<16x128xf32>
    %92 = tpu.reciprocal %91 {approx = true} : vector<16x128xf32> -> vector<16x128xf32>
    %93 = arith.mulf %85, %92 : vector<16x128xf32>
    %94 = vector.broadcast %51 : vector<16x1xf32> to vector<16x128xf32>
    %95 = vector.broadcast %63 : vector<1x128xf32> to vector<16x128xf32>
    %96 = arith.maximumf %94, %95 : vector<16x128xf32>
    %97 = vector.broadcast %45 : vector<16x1xf32> to vector<16x128xf32>
    %98 = vector.broadcast %57 : vector<1x128xf32> to vector<16x128xf32>
    %99 = arith.minimumf %97, %98 : vector<16x128xf32>
    %100 = arith.subf %96, %99 : vector<16x128xf32>
    %101 = vector.broadcast %54 : vector<16x1xf32> to vector<16x128xf32>
    %102 = vector.broadcast %66 : vector<1x128xf32> to vector<16x128xf32>
    %103 = arith.maximumf %101, %102 : vector<16x128xf32>
    %104 = vector.broadcast %48 : vector<16x1xf32> to vector<16x128xf32>
    %105 = vector.broadcast %60 : vector<1x128xf32> to vector<16x128xf32>
    %106 = arith.minimumf %104, %105 : vector<16x128xf32>
    %107 = arith.subf %103, %106 : vector<16x128xf32>
    %108 = arith.mulf %100, %107 : vector<16x128xf32>
    %109 = arith.subf %108, %91 : vector<16x128xf32>
    %110 = tpu.reciprocal %108 {approx = true} : vector<16x128xf32> -> vector<16x128xf32>
    %111 = arith.mulf %109, %110 : vector<16x128xf32>
    %112 = arith.subf %93, %111 : vector<16x128xf32>
    %cst_19 = arith.constant 1.000000e+00 : f32
    %113 = vector.broadcast %cst_19 : f32 to vector<16x128xf32>
    %114 = arith.mulf %113, %42 : vector<16x128xf32>
    %115 = arith.addf %13, %114 : vector<16x128xf32>
    %cst_20 = arith.constant 1.000000e+00 : f32
    %116 = vector.broadcast %cst_20 : f32 to vector<16x128xf32>
    %117 = arith.mulf %116, %112 : vector<16x128xf32>
    %118 = arith.subf %115, %117 : vector<16x128xf32>
    %c0_21 = arith.constant 0 : index
    %c0_22 = arith.constant 0 : index
    %119 = vector.load %arg5[%c0_21, %c0_22] : memref<16x128xf32, #tpu.memory_space<vmem>>, vector<16x128xf32>
    tpu.vector_store %arg5[%c0_21, %c0_22], %118 {strides = array<i32>} : memref<16x128xf32, #tpu.memory_space<vmem>>, vector<16x128xf32>,
    return
  }
  func.func @transform_0(%arg0: i32) -> (i32, i32) {
    %c0_i32 = arith.constant 0 : i32
    %c0_i32_0 = arith.constant 0 : i32
    return %arg0, %c0_i32 : i32, i32
  }
  func.func @transform_1(%arg0: i32) -> (i32, i32) {
    %c0_i32 = arith.constant 0 : i32
    %c0_i32_0 = arith.constant 0 : i32
    %c0_i32_1 = arith.constant 0 : i32
    return %c0_i32, %c0_i32_0 : i32, i32
  }
  func.func @transform_2(%arg0: i32) -> (i32, i32) {
    %c0_i32 = arith.constant 0 : i32
    %c0_i32_0 = arith.constant 0 : i32
    return %arg0, %c0_i32 : i32, i32
  }
  func.func @transform_3(%arg0: i32) -> (i32, i32) {
    %c0_i32 = arith.constant 0 : i32
    %c0_i32_0 = arith.constant 0 : i32
    %c0_i32_1 = arith.constant 0 : i32
    return %c0_i32, %c0_i32_0 : i32, i32
  }
  func.func @transform_4(%arg0: i32) -> (i32, i32) {
    %c0_i32 = arith.constant 0 : i32
    %c0_i32_0 = arith.constant 0 : i32
    return %arg0, %c0_i32 : i32, i32
  }
}

</mosaic_0001>

<llo_original>
// kernel: tpu_custom_call.1
$region0: #{tpu_custom_call.1}
  #allocation0 [shape = 'u32[]', space=smem, size = 0x4, offset = 0x4, fixed_abs, tag = 'smem constant byte address 0x4 - core index']
  #allocation1 [shape = 'u32[144,128]{1,0:T(1,128)}', space=vmem, size = 0x12000, scoped, tag = 'internal scratch']
  %s0 = inlined_call_operand.vmem [shape: f32[16,16], index: 0, kind: input, shape index: {}]
  %s1 = inlined_call_operand.hbm [shape: bf16[16,128], index: 1, kind: input, shape index: {}]
  %s2 = inlined_call_operand.vmem [shape: f32[16,4], index: 2, kind: input, shape index: {}]
  %s3 = inlined_call_operand.vmem [shape: f32[4,128], index: 3, kind: input, shape index: {}]
  %s4 = inlined_call_operand.hbm [shape: f32[16,128], index: 4, kind: output, shape index: {}]
  %s5 = sld [smem:[#allocation0]]
  $region30: #{tpu_custom_call.1} parent=0
    _
  %s7 = ssub.s32 1, %s5
  %s8 = scalar_select 0, %s7, %s5
  $region1: #{tpu_custom_call.1} parent=0
    #allocation2 [shape = 'u8[4096]{0}', space=vmem, size = 0x1000, scoped, tag = 'input window, operand 1, single buffered']
    #allocation3 [shape = 's32[1]{0}', space=sflag, size = 0x4, scoped, tag = 'scoped memory for tpu_custom_call.1']
    #allocation4 [shape = 's32[1]{0}', space=sflag, size = 0x4, scoped, tag = 'scoped memory for tpu_custom_call.1']
    #allocation5 [shape = 'u8[8192]{0}', space=vmem, size = 0x2000, scoped, tag = 'output window, operand 0, single buffered']
    %9 = vsyncpa [#allocation3], 0
    %10 = vsyncpa [#allocation4], 0
    // Predicated region
    $region2: #{tpu_custom_call.1} parent=1 // pred_check
      _
    $region3: #{tpu_custom_call.1} parent=1 // pred_check_branch
      %12 = sbr.rel (0) target = $region5
    $region4: #{tpu_custom_call.1} parent=1 // pred_region
      _
    $region5: #{tpu_custom_call.1} parent=1 // pred_fallthru
      _
    // Predicated region
    $region6: #{tpu_custom_call.1} parent=1 // pred_check
      _
    $region7: #{tpu_custom_call.1} parent=1 // pred_check_branch
      %14 = sbr.rel (0) target = $region9
    $region8: #{tpu_custom_call.1} parent=1 // pred_region
      %s16 = ssub.s32 128, 128
      %17 = vsyncadd [#allocation3], %s16
      %s18 = sshll.u32 [#allocation2], 4
      %s19 = int_to_ptr.vmem [resolvable:$true] %s18
      %24 = dma.hbm_to_vmem [thread:$0]  %s1, 128, %s19, [#allocation3], 64, 64, 4
    $region9: #{tpu_custom_call.1} parent=1 // pred_fallthru
      _
    // Predicated region
    $region10: #{tpu_custom_call.1} parent=1 // pred_check
      _
    $region11: #{tpu_custom_call.1} parent=1 // pred_check_branch
      %26 = sbr.rel (0) target = $region13
    $region12: #{tpu_custom_call.1} parent=1 // pred_region
      _
    $region13: #{tpu_custom_call.1} parent=1 // pred_fallthru
      _
    // Predicated region
    $region14: #{tpu_custom_call.1} parent=1 // pred_check
      _
    $region15: #{tpu_custom_call.1} parent=1 // pred_check_branch
      %28 = sbr.rel (0) target = $region17
    $region16: #{tpu_custom_call.1} parent=1 // pred_region
      _
    $region17: #{tpu_custom_call.1} parent=1 // pred_fallthru
      _
    // Predicated region
    $region18: #{tpu_custom_call.1} parent=1 // pred_check
      _
    $region19: #{tpu_custom_call.1} parent=1 // pred_check_branch
      %30 = sbr.rel (0) target = $region21
    $region20: #{tpu_custom_call.1} parent=1 // pred_region
      %31 = dma.done [#allocation3], 128
    $region21: #{tpu_custom_call.1} parent=1 // pred_fallthru
      _
    %v33 = vld [vmem:[%s0] sm:$0xff]
    %v34 = vld [vmem:[%s0 + $0x8] sm:$0xff]
    %vm35 = vcmask 130048
    %v36 = vsel %vm35, %v33, -inf
    %37 = vmax.xlane.f32.xlu0 %v36
    %v38 = vpop.xlane.xlu0 %37
    %v39 = vsel %vm35, %v34, -inf
    %40 = vmax.xlane.f32.xlu0 %v39
    %v41 = vpop.xlane.xlu0 %40
    %v42 = vsub.f32 %v33, %v38
    %v43 = vsub.f32 %v34, %v41
    %v44 = vmul.f32 %v42, 1.442695
    %v45 = vpow.pop %v44
    %v46 = vmul.f32 %v43, 1.442695
    %v47 = vpow.pop %v46
    %v48 = vsel %vm35, %v45, 0.0
    %49 = vadd.xlane.f32.xlu0 %v48
    %v50 = vpop.xlane.xlu0 %49
    %v51 = vsel %vm35, %v47, 0.0
    %52 = vadd.xlane.f32.xlu0 %v51
    %v53 = vpop.xlane.xlu0 %52
    %v54 = vrcp.pop %v50
    %v55 = vrcp.pop %v53
    %v56 = vmul.f32 %v45, %v54
    %v57 = vmul.f32 %v47, %v55
    %v58 = vpack.c.bf16 %v57, %v56
    %v59 = vld [vmem:[#allocation2] sm:$0xf]
    %v60 = vld [vmem:[#allocation2 + $0x4] sm:$0xf]
    %v61 = vld [vmem:[%s2] sm:$0xff]
    %v62 = vld [vmem:[%s2 + $0x8] sm:$0xff]
    %v63 = vld [vmem:[%s3] sm:$0xf]
    %65 = vset.pattern.permute.xlu0 0
    %66 = vperm.xlu0 %65, %v61
    %v67 = vpop.permute.xlu0 %66
    %70 = vset.pattern.permute.xlu0 0
    %71 = vperm.xlu0 %70, %v62
    %v72 = vpop.permute.xlu0 %71
    %v74 = vlaneseq
    %v75 = vshrl.u32 %v74, 7
    %v76 = vsub.s32 0, %v75
    %v77 = vrot.slane %v63, %v76
    %v78 = vsub.f32 %v67, %v77
    %v79 = vsub.f32 %v72, %v77
    %v80 = vand.u32 2147483647, %v78
    %v81 = vand.u32 2147483647, %v79
    %82 = vset.pattern.permute.xlu0 1
    %83 = vperm.xlu0 %82, %v61
    %v84 = vpop.permute.xlu0 %83
    %86 = vset.pattern.permute.xlu0 1
    %87 = vperm.xlu0 %86, %v62
    %v88 = vpop.permute.xlu0 %87
    %v90 = vlaneseq
    %v91 = vshrl.u32 %v90, 7
    %v92 = vsub.s32 1, %v91
    %v93 = vrot.slane %v63, %v92
    %v94 = vsub.f32 %v84, %v93
    %v95 = vsub.f32 %v88, %v93
    %v96 = vand.u32 2147483647, %v94
    %v97 = vand.u32 2147483647, %v95
    %v98 = vadd.f32 %v80, %v96
    %v99 = vadd.f32 %v81, %v97
    %100 = vset.pattern.permute.xlu0 2
    %101 = vperm.xlu0 %100, %v61
    %v102 = vpop.permute.xlu0 %101
    %104 = vset.pattern.permute.xlu0 2
    %105 = vperm.xlu0 %104, %v62
    %v106 = vpop.permute.xlu0 %105
    %v108 = vlaneseq
    %v109 = vshrl.u32 %v108, 7
    %v110 = vsub.s32 2, %v109
    %v111 = vrot.slane %v63, %v110
    %v112 = vsub.f32 %v102, %v111
    %v113 = vsub.f32 %v106, %v111
    %v114 = vand.u32 2147483647, %v112
    %v115 = vand.u32 2147483647, %v113
    %v116 = vadd.f32 %v98, %v114
    %v117 = vadd.f32 %v99, %v115
    %118 = vset.pattern.permute.xlu0 3
    %119 = vperm.xlu0 %118, %v61
    %v120 = vpop.permute.xlu0 %119
    %122 = vset.pattern.permute.xlu0 3
    %123 = vperm.xlu0 %122, %v62
    %v124 = vpop.permute.xlu0 %123
    %v126 = vlaneseq
    %v127 = vshrl.u32 %v126, 7
    %v128 = vsub.s32 3, %v127
    %v129 = vrot.slane %v63, %v128
    %v130 = vsub.f32 %v120, %v129
    %v131 = vsub.f32 %v124, %v129
    %v132 = vand.u32 2147483647, %v130
    %v133 = vand.u32 2147483647, %v131
    %v134 = vadd.f32 %v116, %v132
    %v135 = vadd.f32 %v117, %v133
    %v136 = vmul.f32 %v61, 0.5
    %v137 = vmul.f32 %v62, 0.5
    %140 = vrot.lane.b32.xlu0 %v136, 126
    %v141 = vpop.permute.xlu0 %140
    %142 = vrot.lane.b32.xlu0 %v137, 126
    %v143 = vpop.permute.xlu0 %142
    %v146 = vsub.f32 %v61, %v141
    %v147 = vsub.f32 %v62, %v143
    %v148 = vadd.f32 %v61, %v141
    %v149 = vadd.f32 %v62, %v143
    %v150 = vmul.f32 %v63, 0.5
    %v152 = vrot.slane %v150, 2
    %v154 = vsub.f32 %v63, %v152
    %v155 = vadd.f32 %v63, %v152
    %157 = vset.pattern.permute.xlu0 0
    %158 = vperm.xlu0 %157, %v148
    %v159 = vpop.permute.xlu0 %158
    %162 = vset.pattern.permute.xlu0 0
    %163 = vperm.xlu0 %162, %v149
    %v164 = vpop.permute.xlu0 %163
    %v166 = vlaneseq
    %v167 = vshrl.u32 %v166, 7
    %v168 = vsub.s32 0, %v167
    %v169 = vrot.slane %v155, %v168
    %v170 = vmin.f32 %v159, %v169
    %v171 = vmin.f32 %v164, %v169
    %173 = vset.pattern.permute.xlu0 0
    %174 = vperm.xlu0 %173, %v146
    %v175 = vpop.permute.xlu0 %174
    %178 = vset.pattern.permute.xlu0 0
    %179 = vperm.xlu0 %178, %v147
    %v180 = vpop.permute.xlu0 %179
    %v182 = vlaneseq
    %v183 = vshrl.u32 %v182, 7
    %v184 = vsub.s32 0, %v183
    %v185 = vrot.slane %v154, %v184
    %v186 = vmax.f32 %v175, %v185
    %v187 = vmax.f32 %v180, %v185
    %v188 = vsub.f32 %v170, %v186
    %v189 = vsub.f32 %v171, %v187
    %v190 = vmax.f32 %v188, 0.0
    %v191 = vmax.f32 %v189, 0.0
    %192 = vset.pattern.permute.xlu0 1
    %193 = vperm.xlu0 %192, %v148
    %v194 = vpop.permute.xlu0 %193
    %196 = vset.pattern.permute.xlu0 1
    %197 = vperm.xlu0 %196, %v149
    %v198 = vpop.permute.xlu0 %197
    %v200 = vlaneseq
    %v201 = vshrl.u32 %v200, 7
    %v202 = vsub.s32 1, %v201
    %v203 = vrot.slane %v155, %v202
    %v204 = vmin.f32 %v194, %v203
    %v205 = vmin.f32 %v198, %v203
    %206 = vset.pattern.permute.xlu0 1
    %207 = vperm.xlu0 %206, %v146
    %v208 = vpop.permute.xlu0 %207
    %210 = vset.pattern.permute.xlu0 1
    %211 = vperm.xlu0 %210, %v147
    %v212 = vpop.permute.xlu0 %211
    %v214 = vlaneseq
    %v215 = vshrl.u32 %v214, 7
    %v216 = vsub.s32 1, %v215
    %v217 = vrot.slane %v154, %v216
    %v218 = vmax.f32 %v208, %v217
    %v219 = vmax.f32 %v212, %v217
    %v220 = vsub.f32 %v204, %v218
    %v221 = vsub.f32 %v205, %v219
    %v222 = vmax.f32 %v220, 0.0
    %v223 = vmax.f32 %v221, 0.0
    %v224 = vmul.f32 %v190, %v222
    %v225 = vmul.f32 %v191, %v223
    %226 = vrot.lane.b32.xlu0 %v61, 127
    %v227 = vpop.permute.xlu0 %226
    %228 = vrot.lane.b32.xlu0 %v62, 127
    %v229 = vpop.permute.xlu0 %228
    %v232 = vmul.f32 %v61, %v227
    %v233 = vmul.f32 %v62, %v229
    %v235 = vrot.slane %v63, 1
    %v237 = vmul.f32 %v63, %v235
    %239 = vset.pattern.permute.xlu0 2
    %240 = vperm.xlu0 %239, %v232
    %v241 = vpop.permute.xlu0 %240
    %244 = vset.pattern.permute.xlu0 2
    %245 = vperm.xlu0 %244, %v233
    %v246 = vpop.permute.xlu0 %245
    %v248 = vlaneseq
    %v249 = vshrl.u32 %v248, 7
    %v250 = vsub.s32 2, %v249
    %v251 = vrot.slane %v237, %v250
    %v252 = vadd.f32 %v241, %v251
    %v253 = vadd.f32 %v246, %v251
    %v254 = vsub.f32 %v252, %v224
    %v255 = vsub.f32 %v253, %v225
    %v256 = vrcp.pop %v254
    %v257 = vrcp.pop %v255
    %v258 = vmul.f32 %v224, %v256
    %v259 = vmul.f32 %v225, %v257
    %v260 = vmax.f32 %v159, %v169
    %v261 = vmax.f32 %v164, %v169
    %v262 = vmin.f32 %v175, %v185
    %v263 = vmin.f32 %v180, %v185
    %v264 = vsub.f32 %v260, %v262
    %v265 = vsub.f32 %v261, %v263
    %v266 = vmax.f32 %v194, %v203
    %v267 = vmax.f32 %v198, %v203
    %v268 = vmin.f32 %v208, %v217
    %v269 = vmin.f32 %v212, %v217
    %v270 = vsub.f32 %v266, %v268
    %v271 = vsub.f32 %v267, %v269
    %v272 = vmul.f32 %v264, %v270
    %v273 = vmul.f32 %v265, %v271
    %v274 = vsub.f32 %v272, %v254
    %v275 = vsub.f32 %v273, %v255
    %v276 = vrcp.pop %v272
    %v277 = vrcp.pop %v273
    %v278 = vmul.f32 %v274, %v276
    %v279 = vmul.f32 %v275, %v277
    %v280 = vsub.f32 %v258, %v278
    %v281 = vsub.f32 %v259, %v279
    %v284 = vunpack.c.l.b16 %v59
    %v285 = vunpack.c.l.b16 %v60
    %v286 = vpack.c.b16 %v285, %v284
    %v289 = vsel %vm35, %v58, 0
    %291 = vmatprep.subr.bf16.mxu0 0
    %292 = vmatpush1.bf16.msra.mxu0 0
    %293 = vmatprep.subr.bf16.mxu0 0
    %294 = vmatpush1.bf16.msra.mxu0 0
    %295 = vmatprep.subr.bf16.mxu0 0
    %296 = vmatpush1.bf16.msra.mxu0 0
    %297 = vmatprep.subr.bf16.mxu0 0
    %298 = vmatpush1.bf16.msra.mxu0 0
    %299 = vmatprep.subr.bf16.mxu0 0
    %300 = vmatpush1.bf16.msra.mxu0 0
    %301 = vmatprep.subr.bf16.mxu0 0
    %302 = vmatpush1.bf16.msra.mxu0 0
    %303 = vmatprep.subr.bf16.mxu0 0
    %304 = vmatpush1.bf16.msra.mxu0 0
    %305 = vmatprep.subr.bf16.mxu0 0
    %306 = vmatpush1.bf16.msra.mxu0 %v286
    %307 = vmatprep.subr.bf16.mxu0 0
    %308 = vmatpush2.bf16.msra.mxu0 0
    %309 = vmatprep.subr.bf16.mxu0 0
    %310 = vmatpush2.bf16.msra.mxu0 0
    %311 = vmatprep.subr.bf16.mxu0 0
    %312 = vmatpush2.bf16.msra.mxu0 0
    %313 = vmatprep.subr.bf16.mxu0 0
    %314 = vmatpush2.bf16.msra.mxu0 0
    %315 = vmatprep.subr.bf16.mxu0 0
    %316 = vmatpush2.bf16.msra.mxu0 0
    %317 = vmatprep.subr.bf16.mxu0 0
    %318 = vmatpush2.bf16.msra.mxu0 0
    %319 = vmatprep.subr.bf16.mxu0 0
    %320 = vmatpush2.bf16.msra.mxu0 0
    %321 = vmatprep.subr.bf16.mxu0 0
    %322 = vmatpush2.bf16.msra.mxu0 0
    %323 = vmatprep.mubr.bf16.mxu0 0
    %324 = vmatmul.mubr.bf16.gmra.mxu0 %v289
    %v325 = vpop.f32.mrf.mxu0
    %v326 = vadd.f32 %v134, %v325
    %v327 = vpop.f32.mrf.mxu0
    %v328 = vpop.f32.mrf.mxu0
    %v329 = vadd.f32 %v135, %v328
    %v330 = vpop.f32.mrf.mxu0
    %331 = vdwg.mxu0
    %v332 = vsub.f32 %v326, %v280
    %v333 = vsub.f32 %v329, %v281
    %334 = vst [vmem:[#allocation5] sm:$0xff] %v332
    %335 = vst [vmem:[#allocation5 + $0x8] sm:$0xff] %v333
    // Predicated region
    $region22: #{tpu_custom_call.1} parent=1 // pred_check
      _
    $region23: #{tpu_custom_call.1} parent=1 // pred_check_branch
      %337 = sbr.rel (0) target = $region25
    $region24: #{tpu_custom_call.1} parent=1 // pred_region
      %s339 = ssub.s32 256, 256
      %340 = vsyncadd [#allocation4], %s339
      %s341 = sshll.u32 [#allocation5], 4
      %s342 = int_to_ptr.vmem [resolvable:$true] %s341
      %347 = dma.vmem_to_hbm [thread:$0]  %s342, 256, %s4, [#allocation4], 128, 128, 8
    $region25: #{tpu_custom_call.1} parent=1 // pred_fallthru
      _
    // Predicated region
    $region26: #{tpu_custom_call.1} parent=1 // pred_check
      _
    $region27: #{tpu_custom_call.1} parent=1 // pred_check_branch
      %349 = sbr.rel (0) target = $region29
    $region28: #{tpu_custom_call.1} parent=1 // pred_region
      %350 = dma.done [#allocation4], 256
    $region29: #{tpu_custom_call.1} parent=1 // pred_fallthru
      _
    %351 = vsyncpa [#allocation3], 1
    %352 = vsyncpa [#allocation4], 1

</llo_original>
